<compile_context>
chip_gen: v7x
topology: tpu7x:2x2x1
jax: 0.10.0
libtpu: 0.0.40
codegen_flags: <defaults>
</compile_context>

<pallas_src>
import math

import jax
import jax.numpy as jnp
from jax import lax
from jax.experimental import pallas as pl
from jax.experimental.pallas import tpu as pltpu

_EPS = 1e-12                           # torch F.normalize default eps
_EPS_SQ = _EPS * _EPS                  # clamp on the squared sum (normal f32)
_TARGET_TILE_BYTES = 4 * 1024 * 1024   # ~4 MiB tiles (padded footprint)
_VMEM_LIMIT_BYTES = 32 * 1024 * 1024   # safe scoped limit on v5e/v6e/v7x


def _round_up(x: int, m: int) -> int:
    return -(-x // m) * m


# --------------------------------------------------------------------------- #
# Kernels
# --------------------------------------------------------------------------- #
def _l2_normalize_mid_kernel(x_ref, o_ref):
    """Normalize over axis 1 (sublane axis) of a (pre_blk, C, lane_tile) tile."""
    x32 = x_ref[...].astype(jnp.float32)
    sq = jnp.sum(x32 * x32, axis=1, keepdims=True)      # XLU sublane reduction
    inv = lax.rsqrt(jnp.maximum(sq, _EPS_SQ))           # EUP; no sqrt + divide
    o_ref[...] = (x32 * inv).astype(o_ref.dtype)        # single cast at the end


def _l2_normalize_last_kernel(x_ref, o_ref):
    """Normalize over the last (lane) axis of a (rows_blk, D) tile."""
    x32 = x_ref[...].astype(jnp.float32)
    sq = jnp.sum(x32 * x32, axis=-1, keepdims=True)
    inv = lax.rsqrt(jnp.maximum(sq, _EPS_SQ))
    o_ref[...] = (x32 * inv).astype(o_ref.dtype)


def _make_packed_last_kernel(width: int, lanes: int):
    """Kernel for dim=-1 with small D: each lane row holds lanes//width packed
    vectors of length `width`. Segmented sum-of-squares is done with a
    block-diagonal ones matmul on the (idle) MXU, so loads/stores stay fully
    lane-dense (no masked vst)."""

    def kernel(x_ref, o_ref):
        x32 = x_ref[...].astype(jnp.float32)
        # Block-diagonal ones matrix: B[i, j] = 1 iff lanes i and j belong to
        # the same length-`width` segment. (lanes x lanes) is tiny (<= 64 KiB).
        seg_i = lax.broadcasted_iota(jnp.int32, (lanes, lanes), 0) // width
        seg_j = lax.broadcasted_iota(jnp.int32, (lanes, lanes), 1) // width
        bdiag = (seg_i == seg_j).astype(jnp.float32)
        # Each output lane receives the sum of squares of its own segment,
        # already broadcast across the segment.
        sq = jnp.dot(x32 * x32, bdiag, preferred_element_type=jnp.float32)
        inv = lax.rsqrt(jnp.maximum(sq, _EPS_SQ))
        o_ref[...] = (x32 * inv).astype(o_ref.dtype)

    return kernel


# --------------------------------------------------------------------------- #
# pallas_call wrappers
# --------------------------------------------------------------------------- #
def _normalize_mid(x3d: jax.Array) -> jax.Array:
    """L2-normalize a (pre, C, post) array over its middle axis."""
    pre, C, post = x3d.shape
    dsize = jnp.dtype(x3d.dtype).itemsize
    sub = max(8, 32 // dsize)              # sublane packing: 8 f32 / 16 bf16 / 32 i8
    c_pad = _round_up(C, sub)              # physical sublane footprint of C

    # Lane tile: multiple of 128 (or full `post` when it is small).
    if post <= 128:
        # TODO(synk): post < 128 still produces masked partial stores; a
        # lane-packing restructure (like the dim=-1 small-D path) would fix it.
        tile_post = post
    else:
        lane_budget = max(128, (_TARGET_TILE_BYTES // (c_pad * dsize)) // 128 * 128)
        if post % 128 == 0:
            tile_post = min(post, lane_budget)
        else:
            tile_post = min((post // 128) * 128, lane_budget)

    post_pad = _round_up(tile_post, 128)
    # Stack leading rows until the *padded* tile reaches ~4 MiB.
    pre_blk = max(1, min(pre, _TARGET_TILE_BYTES // (c_pad * post_pad * dsize)))

    # v7x megacore: make sure both TensorCores receive at least one grid step.
    if pre >= 2 and pl.cdiv(pre, pre_blk) * pl.cdiv(post, tile_post) < 2:
        pre_blk = -(-pre // 2)

    # Grid order (i outer, j inner): the inner j axis walks the contiguous
    # minor HBM dim -> large sequential DMA descriptors. Do not swap.
    grid = (pl.cdiv(pre, pre_blk), pl.cdiv(post, tile_post))
    return pl.pallas_call(
        _l2_normalize_mid_kernel,
        out_shape=jax.ShapeDtypeStruct(x3d.shape, x3d.dtype),
        grid=grid,
        in_specs=[pl.BlockSpec((pre_blk, C, tile_post), lambda i, j: (i, 0, j))],
        out_specs=pl.BlockSpec((pre_blk, C, tile_post), lambda i, j: (i, 0, j)),
        compiler_params=pltpu.CompilerParams(
            dimension_semantics=("parallel", "parallel"),
            vmem_limit_bytes=_VMEM_LIMIT_BYTES,
        ),
    )(x3d)


def _rowwise_pallas(x2d: jax.Array, kernel) -> jax.Array:
    """Run a row-independent kernel over a (M, L) array, tiled along rows."""
    M, L = x2d.shape
    dsize = jnp.dtype(x2d.dtype).itemsize
    l_pad = _round_up(L, 128)

    if M <= 8:
        rows_blk = M
    else:
        max_rows = M if M % 8 == 0 else (M // 8) * 8
        budget_rows = max(8, (_TARGET_TILE_BYTES // (l_pad * dsize)) // 8 * 8)
        rows_blk = min(budget_rows, max_rows)
        # v7x megacore: guarantee >= 2 grid steps when the rows can be split.
        if pl.cdiv(M, rows_blk) < 2:
            rows_blk = _round_up(-(-M // 2), 8)

    grid = (pl.cdiv(M, rows_blk),)
    return pl.pallas_call(
        kernel,
        out_shape=jax.ShapeDtypeStruct(x2d.shape, x2d.dtype),
        grid=grid,
        in_specs=[pl.BlockSpec((rows_blk, L), lambda i: (i, 0))],
        out_specs=pl.BlockSpec((rows_blk, L), lambda i: (i, 0)),
        compiler_params=pltpu.CompilerParams(
            dimension_semantics=("parallel",),
            vmem_limit_bytes=_VMEM_LIMIT_BYTES,
        ),
    )(x2d)


def _normalize_last(x2d: jax.Array) -> jax.Array:
    """L2-normalize a (M, D) array over its last axis (dim is the last axis)."""
    M, D = x2d.shape

    # Lane-dense packed path for small D: avoids masked vst on every step.
    if 0 < D < 128 and 128 % D == 0 and M % (128 // D) == 0:
        g = 128 // D
        packed = x2d.reshape(M // g, g * D)            # free view, contiguous
        out = _rowwise_pallas(packed, _make_packed_last_kernel(D, g * D))
        return out.reshape(M, D)

    # TODO(synk): D < 128 that doesn't divide 128 (or M not a multiple of the
    # packing factor) falls through to masked partial stores below.
    return _rowwise_pallas(x2d, _l2_normalize_last_kernel)


# --------------------------------------------------------------------------- #
# Module
# --------------------------------------------------------------------------- #
class Normalize:
    """JAX/Pallas equivalent of the PyTorch Normalize module (F.normalize, p=2)."""

    def __init__(self, dim: int):
        self.dim = dim

    def __call__(self, x: jax.Array) -> jax.Array:
        dim = self.dim % x.ndim
        shape = x.shape
        C = shape[dim]
        pre = math.prod(shape[:dim])
        post = math.prod(shape[dim + 1:])

        if post == 1:
            # Normalization axis is (effectively) the last one: lane reduction.
            y = _normalize_last(x.reshape(pre, C))
        else:
            # Pure reshape (no transpose / extra HBM traffic); reduce over the
            # sublane axis and keep trailing dims lane-dense.
            y = _normalize_mid(x.reshape(pre, C, post))
        return y.reshape(shape)


if __name__ == "__main__":
    key = jax.random.PRNGKey(0)
    # NCHW input, normalize over the channel dim (dim=1), like the PyTorch module.
    x = jax.random.normal(key, (2, 4, 16, 16), dtype=jnp.float32)

    model = Normalize(dim=1)
    y = jax.block_until_ready(model(x))

    # Reference (same semantics as torch F.normalize).
    norm = jnp.sqrt(jnp.sum(x * x, axis=1, keepdims=True))
    ref = x / jnp.maximum(norm, _EPS)
    assert y.shape == x.shape and y.dtype == x.dtype
    assert float(jnp.max(jnp.abs(y - ref))) < 1e-5

    # Last-axis path with small D -> packed lane-dense kernel (MXU segmented sum).
    y_last = jax.block_until_ready(Normalize(dim=-1)(x))
    norm_l = jnp.sqrt(jnp.sum(x * x, axis=-1, keepdims=True))
    ref_l = x / jnp.maximum(norm_l, _EPS)
    assert float(jnp.max(jnp.abs(y_last - ref_l))) < 1e-5

    # Last-axis path with D >= 128 -> plain lane-reduction kernel.
    x2 = jax.random.normal(jax.random.PRNGKey(1), (8, 256), dtype=jnp.float32)
    y2 = jax.block_until_ready(Normalize(dim=-1)(x2))
    norm2 = jnp.sqrt(jnp.sum(x2 * x2, axis=-1, keepdims=True))
    ref2 = x2 / jnp.maximum(norm2, _EPS)
    assert float(jnp.max(jnp.abs(y2 - ref2))) < 1e-5

    print("KERNEL_OK")
</pallas_src>

<mosaic_0001>
module attributes {stable_mosaic.version = 11 : i64} {
  func.func @_l2_normalize_mid_kernel(%arg0: i32, %arg1: i32, %arg2: memref<1x4x256xf32, #tpu.memory_space<vmem>>, %arg3: memref<1x4x256xf32, #tpu.memory_space<vmem>>) attributes {dimension_semantics = [#tpu.dimension_semantics<parallel>, #tpu.dimension_semantics<parallel>], iteration_bounds = array<i64: 2, 1>, scalar_prefetch = 0 : i64, scratch_operands = 0 : i64, tpu.core_type = #tpu.core_type<tc>, window_params = [{transform_indices = @transform_0, window_bounds = array<i64: 1, 4, 256>}, {transform_indices = @transform_1, window_bounds = array<i64: 1, 4, 256>}]} {
    %c0 = arith.constant 0 : index
    %c0_0 = arith.constant 0 : index
    %c0_1 = arith.constant 0 : index
    %0 = vector.load %arg2[%c0, %c0_0, %c0_1] : memref<1x4x256xf32, #tpu.memory_space<vmem>>, vector<1x4x256xf32>
    %1 = arith.mulf %0, %0 : vector<1x4x256xf32>
    %cst = arith.constant dense<0.000000e+00> : vector<1x256xf32>
    %2 = vector.multi_reduction <add>, %1, %cst [1] : vector<1x4x256xf32> to vector<1x256xf32>
    %3 = vector.shape_cast %2 : vector<1x256xf32> to vector<1x1x256xf32>
    %cst_2 = arith.constant 1.000000e-24 : f32
    %4 = vector.broadcast %cst_2 : f32 to vector<1x1x256xf32>
    %5 = arith.maximumf %3, %4 : vector<1x1x256xf32>
    %6 = math.rsqrt %5 : vector<1x1x256xf32>
    %7 = vector.broadcast %6 : vector<1x1x256xf32> to vector<1x4x256xf32>
    %8 = arith.mulf %0, %7 : vector<1x4x256xf32>
    %c0_3 = arith.constant 0 : index
    %c0_4 = arith.constant 0 : index
    %c0_5 = arith.constant 0 : index
    %9 = vector.load %arg3[%c0_3, %c0_4, %c0_5] : memref<1x4x256xf32, #tpu.memory_space<vmem>>, vector<1x4x256xf32>
    tpu.vector_store %arg3[%c0_3, %c0_4, %c0_5], %8 {strides = array<i32>} : memref<1x4x256xf32, #tpu.memory_space<vmem>>, vector<1x4x256xf32>,
    return
  }
  func.func @transform_0(%arg0: i32, %arg1: i32) -> (i32, i32, i32) {
    %c0_i32 = arith.constant 0 : i32
    %c0_i32_0 = arith.constant 0 : i32
    return %arg0, %c0_i32, %arg1 : i32, i32, i32
  }
  func.func @transform_1(%arg0: i32, %arg1: i32) -> (i32, i32, i32) {
    %c0_i32 = arith.constant 0 : i32
    %c0_i32_0 = arith.constant 0 : i32
    return %arg0, %c0_i32, %arg1 : i32, i32, i32
  }
}

</mosaic_0001>

<llo_original>
// kernel: tpu_custom_call.1
$region0: #{tpu_custom_call.1}
  #allocation0 [shape = 'u32[]', space=smem, size = 0x4, offset = 0x4, fixed_abs, tag = 'smem constant byte address 0x4 - core index']
  #allocation1 [shape = 'u32[144,128]{1,0:T(1,128)}', space=vmem, size = 0x12000, scoped, tag = 'internal scratch']
  %s0 = inlined_call_operand.hbm [shape: f32[2,4,256], index: 0, kind: input, shape index: {}]
  %s1 = inlined_call_operand.hbm [shape: f32[2,4,256], index: 1, kind: output, shape index: {}]
  %s2 = sld [smem:[#allocation0]]
  $region41: #{tpu_custom_call.1} parent=0
    _
  %s4 = ssub.s32 1, %s2
  %s5 = scalar_select 0, %s4, %s2
  $region1: #{tpu_custom_call.1} parent=0
    #allocation2 [shape = 'u8[8192]{0}', space=vmem, size = 0x2000, scoped, tag = 'input window, operand 0']
    #allocation3 [shape = 's32[2]{0}', space=sflag, size = 0x8, scoped, tag = 'scoped memory for tpu_custom_call.1']
    #allocation4 [shape = 's32[2]{0}', space=sflag, size = 0x8, scoped, tag = 'scoped memory for tpu_custom_call.1']
    #allocation5 [shape = 'u8[8192]{0}', space=vmem, size = 0x2000, scoped, tag = 'output window, operand 0']
    %6 = vsyncpa [#allocation3], 0
    %s7 = scalar_lea.sflag [#allocation3], 1
    %8 = vsyncpa %s7, 0
    %9 = vsyncpa [#allocation4], 0
    %s10 = scalar_lea.sflag [#allocation4], 1
    %11 = vsyncpa %s10, 0
    loop: start=0, step=1, limit=4
    $region2: #{tpu_custom_call.1} parent=1 // loop_pre_header
      _
    $region3: #{tpu_custom_call.1} parent=1 // loop_header
      %s13 = sphi 0, %s17
      %p14 = scmp.ge.s32.totalorder %s13, 4
      %s20 = sphi 0, %s32
      %s21 = sphi 0, %s28
      %s22 = sphi 0, %s20
      %s23 = sphi 0, %s21
      %s24 = sphi 0, %s22
      %s25 = sphi 0, %s23
      %s37 = sphi 0, %s39
      %s40 = sphi 0, %s37
      %s41 = sphi 0, %s40
      %s57 = sphi 0, %s41
      %s65 = sphi 0, %s67
      %s68 = sphi 0, %s65
      %s69 = sphi 0, %s68
      %s85 = sphi 0, %s69
    $region4: #{tpu_custom_call.1} parent=1 // loop_header_branch
      %16 = sbr.rel (%p14) target = $region8
    $region5: #{tpu_custom_call.1} parent=1 // loop_body
      %s18 = ssub.s32 %s13, 1
      %s19 = ssub.s32 %s13, 2
      %s26 = sadd.s32 1, %s21
      %p27 = scmp.ge.s32.totalorder %s26, 1
      %s28 = scalar_select %p27, 0, %s26
      %s29 = sadd.s32 1, %s20
      %s30 = scalar_select %p27, %s29, %s20
      %p31 = scmp.ge.s32.totalorder %s30, 2
      %s32 = scalar_select %p31, 0, %s30
      %s33 = ssub.s32 %s20, %s32
      %s34 = ssub.s32 %s21, %s28
      %s35 = sor.u32 %s33, %s34
      %p36 = scmp.eq.s32.totalorder %s35, 0
      %s38 = sadd.s32 %s37, 1
      %s39 = scalar_select %p36, %s37, %s38
      %p42 = pneg %p36
      %p43 = scmp.eq.s32.totalorder %s13, 1
      %p44 = por %p42, %p43
      %p45 = scmp.ne.s32.totalorder %s37, %s40
      %p46 = scmp.eq.s32.totalorder %s13, 0
      %p47 = por %p45, %p46
      %p48 = scmp.ne.s32.totalorder %s37, %s40
      %p49 = scmp.eq.s32.totalorder %s18, 1
      %p50 = por %p48, %p49
      %p51 = scmp.ne.s32.totalorder %s40, %s41
      %p52 = scmp.eq.s32.totalorder %s18, 0
      %p53 = por %p51, %p52
      %p54 = scmp.ne.s32.totalorder %s40, %s41
      %p55 = scmp.eq.s32.totalorder %s19, 1
      %p56 = por %p54, %p55
      %p58 = scmp.ne.s32.totalorder %s41, %s57
      %p59 = scmp.eq.s32.totalorder %s19, 0
      %p60 = por %p58, %p59
      %s61 = ssub.s32 %s20, %s32
      %s62 = ssub.s32 %s21, %s28
      %s63 = sor.u32 %s61, %s62
      %p64 = scmp.eq.s32.totalorder %s63, 0
      %s66 = sadd.s32 %s65, 1
      %s67 = scalar_select %p64, %s65, %s66
      %p70 = pneg %p64
      %p71 = scmp.eq.s32.totalorder %s13, 1
      %p72 = por %p70, %p71
      %p73 = scmp.ne.s32.totalorder %s65, %s68
      %p74 = scmp.eq.s32.totalorder %s13, 0
      %p75 = por %p73, %p74
      %p76 = scmp.ne.s32.totalorder %s65, %s68
      %p77 = scmp.eq.s32.totalorder %s18, 1
      %p78 = por %p76, %p77
      %p79 = scmp.ne.s32.totalorder %s68, %s69
      %p80 = scmp.eq.s32.totalorder %s18, 0
      %p81 = por %p79, %p80
      %p82 = scmp.ne.s32.totalorder %s68, %s69
      %p83 = scmp.eq.s32.totalorder %s19, 1
      %p84 = por %p82, %p83
      %p86 = scmp.ne.s32.totalorder %s69, %s85
      %p87 = scmp.eq.s32.totalorder %s19, 0
      %p88 = por %p86, %p87
      %p89 = scmp.le.s32.totalorder 1, %s13
      %p90 = scmp.lt.s32.totalorder %s13, 3
      %p91 = pnand %p89, %p90
      %p92 = pneg %p91
      // Predicated region
      $region9: #{tpu_custom_call.1} parent=5 // pred_check
        _
      $region10: #{tpu_custom_call.1} parent=5 // pred_check_branch
        %94 = sbr.rel (%p91) target = $region12
      $region11: #{tpu_custom_call.1} parent=5 // pred_region
        %s95 = ssub.s32 %s13, 1
      $region12: #{tpu_custom_call.1} parent=5 // pred_fallthru
        _
      %p96 = scmp.lt.s32.totalorder %s13, 2
      // Predicated region
      $region13: #{tpu_custom_call.1} parent=5 // pred_check
        %p97 = pneg %p96
      $region14: #{tpu_custom_call.1} parent=5 // pred_check_branch
        %99 = sbr.rel (%p97) target = $region16
      $region15: #{tpu_custom_call.1} parent=5 // pred_region
        // Predicated region
        $region17: #{tpu_custom_call.1} parent=15 // pred_check
          %p100 = pneg %p47
        $region18: #{tpu_custom_call.1} parent=15 // pred_check_branch
          %102 = sbr.rel (%p100) target = $region20
        $region19: #{tpu_custom_call.1} parent=15 // pred_region
          %s103 = sand.u32 %s37, 1
          %s104 = scalar_lea.sflag [#allocation3], %s103
          %s105 = sand.u32 %s37, 1
          %s106 = smul.addr %s105, 8
          %s107 = scalar_lea.vmem [#allocation2], %s106
          %s108 = smul.u32 2, %s21
          %s110 = ssub.s32 128, 128
          %111 = vsyncadd %s104, %s110
          %s112 = smul.addr %s20, 2
          %s113 = sadd.s32 %s108, %s112
          %s114 = smul.addr %s113, 64
          %s115 = scalar_lea.hbm %s0, %s114
          %s117 = sshll.u32 %s107, 4
          %s118 = int_to_ptr.vmem [resolvable:$true] %s117
          %120 = dma.hbm_to_vmem [thread:$0]  %s115, 128, %s118, %s104
        $region20: #{tpu_custom_call.1} parent=15 // pred_fallthru
          _
      $region16: #{tpu_custom_call.1} parent=5 // pred_fallthru
        _
      %p121 = scmp.le.s32.totalorder 1, %s13
      %p122 = scmp.lt.s32.totalorder %s13, 3
      %p123 = pnand %p121, %p122
      %p124 = pneg %p123
      // Predicated region
      $region21: #{tpu_custom_call.1} parent=5 // pred_check
        _
      $region22: #{tpu_custom_call.1} parent=5 // pred_check_branch
        %126 = sbr.rel (%p123) target = $region24
      $region23: #{tpu_custom_call.1} parent=5 // pred_region
        %s127 = ssub.s32 %s13, 1
        %s128 = sand.u32 %s40, 1
        %s129 = scalar_lea.sflag [#allocation3], %s128
        %s130 = sand.u32 %s40, 1
        %s131 = smul.addr %s130, 8
        %s132 = scalar_lea.vmem [#allocation2], %s131
        // Predicated region
        $region25: #{tpu_custom_call.1} parent=23 // pred_check
          %p133 = pneg %p53
        $region26: #{tpu_custom_call.1} parent=23 // pred_check_branch
          %135 = sbr.rel (%p133) target = $region28
        $region27: #{tpu_custom_call.1} parent=23 // pred_region
          %136 = dma.done %s129, 128
        $region28: #{tpu_custom_call.1} parent=23 // pred_fallthru
          _
        %s137 = sand.u32 %s40, 1
        %s138 = scalar_lea.sflag [#allocation3], %s137
        %s139 = sand.u32 %s40, 1
        %s140 = smul.addr %s139, 8
        %s141 = scalar_lea.vmem [#allocation2], %s140
        %p142 = pneg %p53
        %p143 = pneg %p50
        %p144 = pneg %p81
        %p145 = pneg %p78
        %s146 = sand.u32 %s68, 1
        %s147 = scalar_lea.sflag [#allocation4], %s146
        %s148 = sand.u32 %s68, 1
        %s149 = smul.addr %s148, 8
        %s150 = scalar_lea.vmem [#allocation5], %s149
        %s151 = smul.u32 2, %s23
        %s152 = smul.u32 2, %s23
        %v153 = vld [vmem:[%s132] sm:$0xff]
        %v154 = vmul.f32 %v153, %v153
        %v156 = vcombine.high %v154, %v154
        %vm158 = vcmask 1043456
        %v159 = vsel %vm158, %v154, 0.0
        %v160 = vrot.slane %v159, 4
        %v161 = vadd.f32 %v159, %v160
        %v162 = vrot.slane %v161, 2
        %v163 = vadd.f32 %v161, %v162
        %v164 = vrot.slane %v163, 1
        %v165 = vadd.f32 %v163, %v164
        %v166 = vsel %vm158, %v156, 0.0
        %v167 = vrot.slane %v166, 4
        %v168 = vadd.f32 %v166, %v167
        %v169 = vrot.slane %v168, 2
        %v170 = vadd.f32 %v168, %v169
        %v171 = vrot.slane %v170, 1
        %v172 = vadd.f32 %v170, %v171
        %v173 = vmax.f32 %v165, 1e-24
        %v174 = vmax.f32 %v172, 1e-24
        %v175 = vrsqrt.pop %v173
        %v176 = vrsqrt.pop %v174
        %v179 = vcombine.low %v175, %v176
        %v181 = vmul.f32 %v153, %v179
        %182 = vst [vmem:[%s150] sm:$0xff] %v181
        %s183 = sand.u32 %s68, 1
        %s184 = scalar_lea.sflag [#allocation4], %s183
        %s185 = sand.u32 %s68, 1
        %s186 = smul.addr %s185, 8
        %s187 = scalar_lea.vmem [#allocation5], %s186
        // Predicated region
        $region29: #{tpu_custom_call.1} parent=23 // pred_check
          %p188 = pneg %p78
        $region30: #{tpu_custom_call.1} parent=23 // pred_check_branch
          %190 = sbr.rel (%p188) target = $region32
        $region31: #{tpu_custom_call.1} parent=23 // pred_region
          %s191 = smul.u32 2, %s23
          %s193 = ssub.s32 128, 128
          %194 = vsyncadd %s184, %s193
          %s195 = smul.addr %s22, 2
          %s196 = sadd.s32 %s191, %s195
          %s197 = smul.addr %s196, 64
          %s198 = scalar_lea.hbm %s1, %s197
          %s200 = sshll.u32 %s187, 4
          %s201 = int_to_ptr.vmem [resolvable:$true] %s200
          %203 = dma.vmem_to_hbm [thread:$0]  %s201, 128, %s198, %s184
        $region32: #{tpu_custom_call.1} parent=23 // pred_fallthru
          _
      $region24: #{tpu_custom_call.1} parent=5 // pred_fallthru
        _
      %p204 = scmp.le.s32.totalorder 2, %s13
      // Predicated region
      $region33: #{tpu_custom_call.1} parent=5 // pred_check
        %p205 = pneg %p204
      $region34: #{tpu_custom_call.1} parent=5 // pred_check_branch
        %207 = sbr.rel (%p205) target = $region36
      $region35: #{tpu_custom_call.1} parent=5 // pred_region
        %s208 = ssub.s32 %s13, 2
        // Predicated region
        $region37: #{tpu_custom_call.1} parent=35 // pred_check
          %p209 = pneg %p84
        $region38: #{tpu_custom_call.1} parent=35 // pred_check_branch
          %211 = sbr.rel (%p209) target = $region40
        $region39: #{tpu_custom_call.1} parent=35 // pred_region
          %s212 = sand.u32 %s69, 1
          %s213 = scalar_lea.sflag [#allocation4], %s212
          %s214 = sand.u32 %s69, 1
          %s215 = smul.addr %s214, 8
          %s216 = scalar_lea.vmem [#allocation5], %s215
          %217 = dma.done %s213, 128
        $region40: #{tpu_custom_call.1} parent=35 // pred_fallthru
          _
      $region36: #{tpu_custom_call.1} parent=5 // pred_fallthru
        _
    $region6: #{tpu_custom_call.1} parent=1 // loop_footer
      %s17 = sadd.s32 1, %s13
    $region7: #{tpu_custom_call.1} parent=1 // loop_footer_branch
      %12 = sbr.rel target = $region3
    $region8: #{tpu_custom_call.1} parent=1 // loop_exit
      _
    %218 = vsyncpa [#allocation3], 1
    %s219 = scalar_lea.sflag [#allocation3], 1
    %220 = vsyncpa %s219, 1
    %221 = vsyncpa [#allocation4], 1
    %s222 = scalar_lea.sflag [#allocation4], 1
    %223 = vsyncpa %s222, 1

</llo_original>
